<compile_context>
chip_gen: v5e
topology: v5e:2x2
jax: 0.10.0
libtpu: 0.0.40
codegen_flags: <defaults>
</compile_context>

<pallas_src>
import jax
import jax.numpy as jnp
from jax.experimental import pallas as pl
from jax.experimental.pallas import tpu as pltpu


def _gap_kernel(x_ref, code_ref, bias_ref, w1_ref, b1_ref, w2_ref, out_ref):
    # x_ref:    (TB*N, F)   node features of TB graphs, flattened (HBM dtype)
    # code_ref: (TB*N, 1)   f32: 1.0 keep logit, 0.0 masked node, 2.0 all-masked graph
    # bias_ref: (TB*N, TB)  f32: 0.0 where node m belongs to graph b, finfo.min else
    # w1_ref:   (F, H) matmul dtype    b1_ref: (1, H) f32    w2_ref: (1, H) f32
    # out_ref:  (TB, 1, F)
    w1 = w1_ref[...]
    xm = x_ref[...].astype(w1.dtype)            # single cast, reused by both GEMMs

    # ---- gate MLP: Linear -> ReLU -> (last Linear done on VPU/XLU, not MXU) --
    h = jnp.dot(xm, w1, preferred_element_type=jnp.float32)          # [M, H] f32
    h = jnp.maximum(h + b1_ref[...], 0.0)
    logit = jnp.sum(h * w2_ref[...], axis=-1, keepdims=True)         # [M, 1] f32
    # (b2 omitted: softmax is shift-invariant, so it cannot change the output.)

    # ---- node mask / all-masked-graph handling, one cheap [M,1] pass ---------
    code = code_ref[...]
    neg = jnp.finfo(jnp.float32).min            # torch masked_fill value
    logit = jnp.where(code == 1.0, logit,
                      jnp.where(code == 2.0, 0.0, neg))

    # ---- per-graph masked softmax over the block-column score matrix S[m,b] --
    s = logit + bias_ref[...]                   # [M, TB]; non-members ~ -inf
    s = s - jnp.max(s, axis=0, keepdims=True)   # column max is always finite
    ex = jnp.exp(s)                             # masked / non-member entries -> 0
    denom = jnp.sum(ex, axis=0, keepdims=True)  # >= 1 by construction
    scores = ex * pl.reciprocal(denom, approx=True)                  # EUP recip

    # ---- context = S^T @ X on the MXU, contracting dim 0 (no transpose) ------
    context = jax.lax.dot_general(
        scores.astype(xm.dtype), xm,
        dimension_numbers=(((0,), (0,)), ((), ())),
        preferred_element_type=jnp.float32)                          # [TB, F]
    out_ref[:, 0, :] = context.astype(out_ref.dtype)


def _choose_tb(B, N, F, H, x_bytes, mm_bytes):
    """Graphs per grid step.

    Constraints / targets:
      * tb divides B               -> no HBM-copy batch padding (no concatenate).
      * (tb*N) % 8 == 0 or tb == B -> (8,128)-legal node blocks.
      * tb <= 32                   -> S^T@x epilogue MXU cost stays ~TB/H of the
                                      gate GEMM.
      * ~24 MiB working-set model (double-buffered x, f32 h, 128-lane-padded
        softmax intermediates) -> safe on v5e/v6e/v7x scoped VMEM.
      * >= 2 grid steps whenever possible -> v7x megacore sharding.
    """
    lane = 128
    Fp = max(((F + lane - 1) // lane) * lane, lane)
    Hp = max(((H + lane - 1) // lane) * lane, lane)
    per_row = (2 * Fp * x_bytes + Fp * mm_bytes + Hp * 4
               + 5 * lane * 4      # [M,1]-style lane-padded columns (mask/logit temps)
               + 5 * lane * 4)     # [M,TB<=128] block-column temps + member bias
    budget = 24 * (1 << 20)
    max_rows = max(N, budget // per_row)
    cap = max(1, min(32, max_rows // N))

    best = None
    for d in range(min(cap, B), 0, -1):
        if B % d:
            continue
        if (d * N) % 8 != 0 and d != B:
            continue
        if best is None:
            best = d
        if B // d >= 2:
            return d                # largest legal divisor that keeps >= 2 steps
    if best is not None:
        return best
    # TODO(synk): no legal divisor <= cap (e.g. odd N with prime B); fall back to
    # a single full-batch block (block == full array is always tile-legal).
    return B


def _vmem_limit_bytes(tb, N, F, H, x_bytes, mm_bytes):
    lane = 128
    M = tb * N
    Fp = max(((F + lane - 1) // lane) * lane, lane)
    Hp = max(((H + lane - 1) // lane) * lane, lane)
    Tp = max(((tb + lane - 1) // lane) * lane, lane)
    est = (2 * M * Fp * x_bytes            # double-buffered x block
           + 2 * M * lane * 4              # double-buffered mask-code column
           + 2 * M * Tp * 4                # member-bias block
           + M * Fp * mm_bytes             # in-kernel matmul-dtype copy of x
           + M * Hp * 4                    # h (f32)
           + 4 * M * lane * 4              # logit / select temps
           + 4 * M * Tp * 4                # block-column logits / exp / scores
           + Fp * Hp * mm_bytes + 4 * Hp * 4   # grid-resident weights
           + 2 * tb * Fp * 4)              # out block
    # Headroom, but stay well under v7x's 64 MiB physical VMEM per TensorCore.
    return int(min(48 * (1 << 20), max(2 * est, 16 * (1 << 20))))


def global_attention_pooling(x, node_mask, w1, b1, w2, b2=None,
                             matmul_dtype=jnp.bfloat16):
    """Pallas forward of GlobalAttentionPooling.

    x: [B, N, F]; node_mask: [B, N] (1 real / 0 pad) or None; w1: [F, H];
    b1: [H]-like; w2: [H, 1]-like; b2 unused (cancels under softmax).
    Returns [B, F] in x.dtype.  matmul_dtype controls the MXU compute dtype
    (bf16 by default; pass jnp.float32 for near-bitwise parity with torch).
    """
    B, N, F = x.shape
    H = w1.shape[-1]

    # Pre-cast / pre-shape the tiny weights once in the wrapper (grid-resident).
    w1p = jnp.asarray(w1).reshape(F, H).astype(matmul_dtype)
    b1p = jnp.asarray(b1, dtype=jnp.float32).reshape(1, H)
    w2p = jnp.asarray(w2, dtype=jnp.float32).reshape(1, H)   # row vector for VPU dot
    # b2 intentionally dropped: it shifts every logit equally -> softmax no-op.

    if node_mask is None:
        node_mask = jnp.ones((B, N), dtype=jnp.float32)
    real = node_mask != 0
    all_masked = jnp.logical_not(jnp.any(real, axis=1, keepdims=True))   # [B, 1]
    # 1.0 -> keep gate logit, 0.0 -> masked node (finfo.min), 2.0 -> all-masked (0.0)
    code = jnp.where(all_masked, 2.0, jnp.where(real, 1.0, 0.0)).astype(jnp.float32)

    x_bytes = jnp.dtype(x.dtype).itemsize
    mm_bytes = jnp.dtype(matmul_dtype).itemsize
    tb = _choose_tb(B, N, F, H, x_bytes, mm_bytes)
    M = tb * N

    # Static graph-membership additive bias, built once, fetched once (constant
    # index_map -> grid-resident).
    row = jnp.arange(M, dtype=jnp.int32)[:, None]
    col = jnp.arange(tb, dtype=jnp.int32)[None, :]
    member_bias = jnp.where(row // N == col, 0.0,
                            jnp.finfo(jnp.float32).min).astype(jnp.float32)

    x_flat = x.reshape(B * N, F)                   # free HBM reshape (no copy pass)
    code_flat = code.reshape(B * N, 1)

    out3 = pl.pallas_call(
        _gap_kernel,
        out_shape=jax.ShapeDtypeStruct((B, 1, F), x.dtype),
        grid_spec=pltpu.PrefetchScalarGridSpec(
            num_scalar_prefetch=0,
            grid=(B // tb,),
            in_specs=[
                pl.BlockSpec((M, F), lambda b: (b, 0)),
                pl.BlockSpec((M, 1), lambda b: (b, 0)),
                pl.BlockSpec((M, tb), lambda b: (0, 0)),   # grid-resident
                pl.BlockSpec((F, H), lambda b: (0, 0)),    # grid-resident
                pl.BlockSpec((1, H), lambda b: (0, 0)),    # grid-resident
                pl.BlockSpec((1, H), lambda b: (0, 0)),    # grid-resident
            ],
            # 3-D output block: last two dims (1, F) equal the full array dims,
            # so any tb (including tb=1 for small batches) is tile-legal while
            # still giving >= 2 grid steps for v7x megacore.
            out_specs=pl.BlockSpec((tb, 1, F), lambda b: (b, 0, 0)),
        ),
        compiler_params=pltpu.CompilerParams(
            dimension_semantics=("parallel",),
            vmem_limit_bytes=_vmem_limit_bytes(tb, N, F, H, x_bytes, mm_bytes),
        ),
    )(x_flat, code_flat, member_bias, w1p, b1p, w2p)
    return out3.reshape(B, F)


def _reference(x, node_mask, w1, b1, w2, b2):
    """Pure-JAX reference mirroring the PyTorch forward (including b2)."""
    h = jnp.maximum(jnp.einsum("bnf,fh->bnh", x, w1) + b1.reshape(1, 1, -1), 0.0)
    logits = jnp.einsum("bnh,ho->bno", h, w2) + b2.reshape(1, 1, 1)      # [B, N, 1]
    mask = node_mask[..., None] == 0
    neg = jnp.finfo(logits.dtype).min
    logits = jnp.where(mask, neg, logits)
    all_masked = jnp.all(mask, axis=1, keepdims=True)
    logits = jnp.where(all_masked, 0.0, logits)
    logits = logits - jnp.max(logits, axis=1, keepdims=True)
    scores = jax.nn.softmax(logits, axis=1)
    scores = jnp.nan_to_num(scores, nan=0.0, posinf=0.0, neginf=0.0)
    return jnp.sum(scores * x, axis=1)


if __name__ == "__main__":
    B, N, F_IN, HID = 2, 8, 16, 32

    key = jax.random.PRNGKey(0)
    kx, k1, k2, k3, k4 = jax.random.split(key, 5)

    x = jax.random.normal(kx, (B, N, F_IN), dtype=jnp.float32)
    w1 = jax.random.normal(k1, (F_IN, HID), dtype=jnp.float32) * (1.0 / F_IN ** 0.5)
    b1 = jax.random.normal(k2, (HID,), dtype=jnp.float32) * 0.01
    w2 = jax.random.normal(k3, (HID, 1), dtype=jnp.float32) * (1.0 / HID ** 0.5)
    b2 = jax.random.normal(k4, (1,), dtype=jnp.float32) * 0.01

    # Mask: first graph has 2 padded nodes, second graph fully real.
    node_mask = jnp.ones((B, N), dtype=jnp.float32)
    node_mask = node_mask.at[0, N - 2:].set(0.0)

    ref = _reference(x, node_mask, w1, b1, w2, b2)

    # 1) f32-MXU path: tight tolerance (covers EUP approx reciprocal, b2 drop).
    out_f32 = global_attention_pooling(x, node_mask, w1, b1, w2, b2,
                                       matmul_dtype=jnp.float32)
    out_f32 = jax.block_until_ready(out_f32)
    assert out_f32.shape == (B, F_IN)
    assert jnp.allclose(out_f32, ref, atol=2e-3, rtol=2e-3), "f32 mismatch vs reference"

    # 2) default bf16-MXU path: relaxed tolerance for the bf16 matmul operands.
    out_bf16 = global_attention_pooling(x, node_mask, w1, b1, w2, b2)
    out_bf16 = jax.block_until_ready(out_bf16)
    assert jnp.allclose(out_bf16, ref, atol=5e-2, rtol=5e-2), "bf16 mismatch vs reference"

    # 3) all-masked-graph branch (torch fills logits with 0 -> uniform pooling).
    node_mask2 = node_mask.at[1, :].set(0.0)
    ref2 = _reference(x, node_mask2, w1, b1, w2, b2)
    out2 = global_attention_pooling(x, node_mask2, w1, b1, w2, b2,
                                    matmul_dtype=jnp.float32)
    out2 = jax.block_until_ready(out2)
    assert jnp.allclose(out2, ref2, atol=2e-3, rtol=2e-3), "all-masked mismatch"

    print("KERNEL_OK")
</pallas_src>

<mosaic_0001>
module attributes {stable_mosaic.version = 11 : i64} {
  func.func @_gap_kernel(%arg0: i32, %arg1: memref<8x16xf32, #tpu.memory_space<vmem>>, %arg2: memref<8x1xf32, #tpu.memory_space<vmem>>, %arg3: memref<8x1xf32, #tpu.memory_space<vmem>>, %arg4: memref<16x32xf32, #tpu.memory_space<vmem>>, %arg5: memref<1x32xf32, #tpu.memory_space<vmem>>, %arg6: memref<1x32xf32, #tpu.memory_space<vmem>>, %arg7: memref<1x1x16xf32, #tpu.memory_space<vmem>>) attributes {dimension_semantics = [#tpu.dimension_semantics<parallel>], iteration_bounds = array<i64: 2>, scalar_prefetch = 0 : i64, scratch_operands = 0 : i64, tpu.core_type = #tpu.core_type<tc>, window_params = [{transform_indices = @transform_0, window_bounds = array<i64: 8, 16>}, {transform_indices = @transform_1, window_bounds = array<i64: 8, 1>}, {pipeline_mode = #tpu.pipeline_mode<synchronous>, transform_indices = @transform_2, window_bounds = array<i64: 8, 1>}, {pipeline_mode = #tpu.pipeline_mode<synchronous>, transform_indices = @transform_3, window_bounds = array<i64: 16, 32>}, {pipeline_mode = #tpu.pipeline_mode<synchronous>, transform_indices = @transform_4, window_bounds = array<i64: 1, 32>}, {pipeline_mode = #tpu.pipeline_mode<synchronous>, transform_indices = @transform_5, window_bounds = array<i64: 1, 32>}, {transform_indices = @transform_6, window_bounds = array<i64: 1, 1, 16>}]} {
    %c0 = arith.constant 0 : index
    %c0_0 = arith.constant 0 : index
    %0 = vector.load %arg4[%c0, %c0_0] : memref<16x32xf32, #tpu.memory_space<vmem>>, vector<16x32xf32>
    %c0_1 = arith.constant 0 : index
    %c0_2 = arith.constant 0 : index
    %1 = vector.load %arg1[%c0_1, %c0_2] : memref<8x16xf32, #tpu.memory_space<vmem>>, vector<8x16xf32>
    %cst = arith.constant dense<0.000000e+00> : vector<8x32xf32>
    %2 = tpu.matmul %1, %0, %cst {dimension_numbers = #tpu.dot_dimension_numbers<[1], [0], [0], [1], [0, 0, 1, 1], [], []>} : vector<8x16xf32>, vector<16x32xf32>, vector<8x32xf32> -> vector<8x32xf32>
    %c0_3 = arith.constant 0 : index
    %c0_4 = arith.constant 0 : index
    %3 = vector.load %arg5[%c0_3, %c0_4] : memref<1x32xf32, #tpu.memory_space<vmem>>, vector<1x32xf32>
    %4 = vector.broadcast %3 : vector<1x32xf32> to vector<8x32xf32>
    %5 = arith.addf %2, %4 : vector<8x32xf32>
    %cst_5 = arith.constant 0.000000e+00 : f32
    %6 = vector.broadcast %cst_5 : f32 to vector<8x32xf32>
    %7 = arith.maximumf %5, %6 : vector<8x32xf32>
    %c0_6 = arith.constant 0 : index
    %c0_7 = arith.constant 0 : index
    %8 = vector.load %arg6[%c0_6, %c0_7] : memref<1x32xf32, #tpu.memory_space<vmem>>, vector<1x32xf32>
    %9 = vector.broadcast %8 : vector<1x32xf32> to vector<8x32xf32>
    %10 = arith.mulf %7, %9 : vector<8x32xf32>
    %cst_8 = arith.constant dense<0.000000e+00> : vector<8xf32>
    %11 = vector.multi_reduction <add>, %10, %cst_8 [1] : vector<8x32xf32> to vector<8xf32>
    %12 = vector.shape_cast %11 : vector<8xf32> to vector<8x1xf32>
    %c0_9 = arith.constant 0 : index
    %c0_10 = arith.constant 0 : index
    %13 = vector.load %arg2[%c0_9, %c0_10] : memref<8x1xf32, #tpu.memory_space<vmem>>, vector<8x1xf32>
    %cst_11 = arith.constant 1.000000e+00 : f32
    %14 = vector.broadcast %cst_11 : f32 to vector<8x1xf32>
    %15 = arith.cmpf oeq, %13, %14 : vector<8x1xf32>
    %cst_12 = arith.constant 2.000000e+00 : f32
    %16 = vector.broadcast %cst_12 : f32 to vector<8x1xf32>
    %17 = arith.cmpf oeq, %13, %16 : vector<8x1xf32>
    %cst_13 = arith.constant 0.000000e+00 : f32
    %cst_14 = arith.constant -3.40282347E+38 : f32
    %18 = vector.broadcast %cst_13 : f32 to vector<8x1xf32>
    %19 = vector.broadcast %cst_14 : f32 to vector<8x1xf32>
    %20 = arith.select %17, %18, %19 : vector<8x1xi1>, vector<8x1xf32>
    %21 = arith.select %15, %12, %20 : vector<8x1xi1>, vector<8x1xf32>
    %c0_15 = arith.constant 0 : index
    %c0_16 = arith.constant 0 : index
    %22 = vector.load %arg3[%c0_15, %c0_16] : memref<8x1xf32, #tpu.memory_space<vmem>>, vector<8x1xf32>
    %23 = arith.addf %21, %22 : vector<8x1xf32>
    %cst_17 = arith.constant dense<0xFF800000> : vector<1xf32>
    %24 = vector.multi_reduction <maximumf>, %23, %cst_17 [0] : vector<8x1xf32> to vector<1xf32>
    %25 = vector.shape_cast %24 : vector<1xf32> to vector<1x1xf32>
    %26 = vector.broadcast %25 : vector<1x1xf32> to vector<8x1xf32>
    %27 = arith.subf %23, %26 : vector<8x1xf32>
    %28 = math.exp %27 : vector<8x1xf32>
    %cst_18 = arith.constant dense<0.000000e+00> : vector<1xf32>
    %29 = vector.multi_reduction <add>, %28, %cst_18 [0] : vector<8x1xf32> to vector<1xf32>
    %30 = vector.shape_cast %29 : vector<1xf32> to vector<1x1xf32>
    %31 = tpu.reciprocal %30 {approx = true} : vector<1x1xf32> -> vector<1x1xf32>
    %32 = vector.broadcast %31 : vector<1x1xf32> to vector<8x1xf32>
    %33 = arith.mulf %28, %32 : vector<8x1xf32>
    %cst_19 = arith.constant dense<0.000000e+00> : vector<1x16xf32>
    %34 = tpu.matmul %33, %1, %cst_19 {dimension_numbers = #tpu.dot_dimension_numbers<[0], [0], [1], [1], [0, 1, 1, 1], [], []>} : vector<8x1xf32>, vector<8x16xf32>, vector<1x16xf32> -> vector<1x16xf32>
    %c0_20 = arith.constant 0 : index
    %c0_21 = arith.constant 0 : index
    %c0_22 = arith.constant 0 : index
    %35 = vector.load %arg7[%c0_20, %c0_21, %c0_22] : memref<1x1x16xf32, #tpu.memory_space<vmem>>, vector<1x1x16xf32>
    %36 = vector.shape_cast %35 : vector<1x1x16xf32> to vector<1x16xf32>
    %37 = vector.shape_cast %34 : vector<1x16xf32> to vector<1x1x16xf32>
    tpu.vector_store %arg7[%c0_20, %c0_21, %c0_22], %37 {strides = array<i32>} : memref<1x1x16xf32, #tpu.memory_space<vmem>>, vector<1x1x16xf32>,
    return
  }
  func.func @transform_0(%arg0: i32) -> (i32, i32) {
    %c0_i32 = arith.constant 0 : i32
    %c0_i32_0 = arith.constant 0 : i32
    return %arg0, %c0_i32 : i32, i32
  }
  func.func @transform_1(%arg0: i32) -> (i32, i32) {
    %c0_i32 = arith.constant 0 : i32
    %c0_i32_0 = arith.constant 0 : i32
    return %arg0, %c0_i32 : i32, i32
  }
  func.func @transform_2(%arg0: i32) -> (i32, i32) {
    %c0_i32 = arith.constant 0 : i32
    %c0_i32_0 = arith.constant 0 : i32
    %c0_i32_1 = arith.constant 0 : i32
    return %c0_i32, %c0_i32_0 : i32, i32
  }
  func.func @transform_3(%arg0: i32) -> (i32, i32) {
    %c0_i32 = arith.constant 0 : i32
    %c0_i32_0 = arith.constant 0 : i32
    %c0_i32_1 = arith.constant 0 : i32
    return %c0_i32, %c0_i32_0 : i32, i32
  }
  func.func @transform_4(%arg0: i32) -> (i32, i32) {
    %c0_i32 = arith.constant 0 : i32
    %c0_i32_0 = arith.constant 0 : i32
    %c0_i32_1 = arith.constant 0 : i32
    return %c0_i32, %c0_i32_0 : i32, i32
  }
  func.func @transform_5(%arg0: i32) -> (i32, i32) {
    %c0_i32 = arith.constant 0 : i32
    %c0_i32_0 = arith.constant 0 : i32
    %c0_i32_1 = arith.constant 0 : i32
    return %c0_i32, %c0_i32_0 : i32, i32
  }
  func.func @transform_6(%arg0: i32) -> (i32, i32, i32) {
    %c0_i32 = arith.constant 0 : i32
    %c0_i32_0 = arith.constant 0 : i32
    %c0_i32_1 = arith.constant 0 : i32
    return %arg0, %c0_i32, %c0_i32_0 : i32, i32, i32
  }
}

</mosaic_0001>

<llo_original>
// kernel: tpu_custom_call.1
$region0: #{tpu_custom_call.1}
  #allocation0 [shape = 'u32[]', space=smem, size = 0x4, offset = 0x4, fixed_abs, tag = 'smem constant byte address 0x4 - core index']
  #allocation1 [shape = 'u32[72,128]{1,0:T(1,128)}', space=vmem, size = 0x9000, scoped, tag = 'internal scratch']
  %s0 = inlined_call_operand.vmem [shape: f32[16,16], index: 0, kind: input, shape index: {}]
  %s1 = inlined_call_operand.vmem [shape: f32[16,1], index: 1, kind: input, shape index: {}]
  %s2 = inlined_call_operand.vmem [shape: f32[8,1], index: 2, kind: input, shape index: {}]
  %s3 = inlined_call_operand.hbm [shape: f32[16,32], index: 3, kind: input, shape index: {}]
  %s4 = inlined_call_operand.vmem [shape: f32[1,32], index: 4, kind: input, shape index: {}]
  %s5 = inlined_call_operand.vmem [shape: f32[1,32], index: 5, kind: input, shape index: {}]
  %s6 = inlined_call_operand.hbm [shape: f32[2,1,16], index: 6, kind: output, shape index: {}]
  %s7 = sld [smem:[#allocation0]]
  $region61: #{tpu_custom_call.1} parent=0
    _
  %s9 = ssub.s32 1, %s7
  %s10 = scalar_select 0, %s9, %s7
  $region1: #{tpu_custom_call.1} parent=0
    #allocation2 [shape = 'u8[8192]{0}', space=vmem, size = 0x2000, scoped, tag = 'input window, operand 3, single buffered']
    #allocation3 [shape = 's32[2]{0}', space=sflag, size = 0x8, scoped, tag = 'scoped memory for tpu_custom_call.1']
    #allocation4 [shape = 's32[2]{0}', space=sflag, size = 0x8, scoped, tag = 'scoped memory for tpu_custom_call.1']
    #allocation5 [shape = 'u8[1024]{0}', space=vmem, size = 0x400, scoped, tag = 'output window, operand 0']
    %11 = vsyncpa [#allocation3], 0
    %12 = vsyncpa [#allocation4], 0
    %s13 = scalar_lea.sflag [#allocation4], 1
    %14 = vsyncpa %s13, 0
    loop: start=0, step=1, limit=4
    $region2: #{tpu_custom_call.1} parent=1 // loop_pre_header
      _
    $region3: #{tpu_custom_call.1} parent=1 // loop_header
      %s16 = sphi 0, %s20
      %p17 = scmp.ge.s32.totalorder %s16, 4
      %s26 = sphi 0, %s28
      %s29 = sphi 0, %s26
      %s30 = sphi 0, %s29
      %s46 = sphi 0, %s30
      %s52 = sphi 0, %s54
      %s55 = sphi 0, %s52
      %s56 = sphi 0, %s55
      %s72 = sphi 0, %s56
      %s76 = sphi 0, %s76
      %s78 = sphi 0, %s76
      %s79 = sphi 0, %s78
      %s93 = sphi 0, %s79
      %s97 = sphi 0, %s97
      %s99 = sphi 0, %s97
      %s100 = sphi 0, %s99
      %s114 = sphi 0, %s100
      %s118 = sphi 0, %s118
      %s120 = sphi 0, %s118
      %s121 = sphi 0, %s120
      %s135 = sphi 0, %s121
      %s139 = sphi 0, %s139
      %s141 = sphi 0, %s139
      %s142 = sphi 0, %s141
      %s156 = sphi 0, %s142
      %s162 = sphi 0, %s164
      %s165 = sphi 0, %s162
      %s166 = sphi 0, %s165
      %s182 = sphi 0, %s166
    $region4: #{tpu_custom_call.1} parent=1 // loop_header_branch
      %19 = sbr.rel (%p17) target = $region8
    $region5: #{tpu_custom_call.1} parent=1 // loop_body
      %s21 = ssub.s32 %s16, 1
      %s22 = ssub.s32 %s16, 2
      %s23 = sadd.s32 %s16, 1
      %s24 = ssub.s32 %s16, %s23
      %p25 = scmp.eq.s32.totalorder %s24, 0
      %s27 = sadd.s32 %s26, 1
      %s28 = scalar_select %p25, %s26, %s27
      %p31 = pneg %p25
      %p32 = scmp.eq.s32.totalorder %s16, 1
      %p33 = por %p31, %p32
      %p34 = scmp.ne.s32.totalorder %s26, %s29
      %p35 = scmp.eq.s32.totalorder %s16, 0
      %p36 = por %p34, %p35
      %p37 = scmp.ne.s32.totalorder %s26, %s29
      %p38 = scmp.eq.s32.totalorder %s21, 1
      %p39 = por %p37, %p38
      %p40 = scmp.ne.s32.totalorder %s29, %s30
      %p41 = scmp.eq.s32.totalorder %s21, 0
      %p42 = por %p40, %p41
      %p43 = scmp.ne.s32.totalorder %s29, %s30
      %p44 = scmp.eq.s32.totalorder %s22, 1
      %p45 = por %p43, %p44
      %p47 = scmp.ne.s32.totalorder %s30, %s46
      %p48 = scmp.eq.s32.totalorder %s22, 0
      %p49 = por %p47, %p48
      %s50 = ssub.s32 %s16, %s23
      %p51 = scmp.eq.s32.totalorder %s50, 0
      %s53 = sadd.s32 %s52, 1
      %s54 = scalar_select %p51, %s52, %s53
      %p57 = pneg %p51
      %p58 = scmp.eq.s32.totalorder %s16, 1
      %p59 = por %p57, %p58
      %p60 = scmp.ne.s32.totalorder %s52, %s55
      %p61 = scmp.eq.s32.totalorder %s16, 0
      %p62 = por %p60, %p61
      %p63 = scmp.ne.s32.totalorder %s52, %s55
      %p64 = scmp.eq.s32.totalorder %s21, 1
      %p65 = por %p63, %p64
      %p66 = scmp.ne.s32.totalorder %s55, %s56
      %p67 = scmp.eq.s32.totalorder %s21, 0
      %p68 = por %p66, %p67
      %p69 = scmp.ne.s32.totalorder %s55, %s56
      %p70 = scmp.eq.s32.totalorder %s22, 1
      %p71 = por %p69, %p70
      %p73 = scmp.ne.s32.totalorder %s56, %s72
      %p74 = scmp.eq.s32.totalorder %s22, 0
      %p75 = por %p73, %p74
      %s77 = sadd.s32 %s76, 1
      %p80 = scmp.eq.s32.totalorder %s16, 1
      %p81 = scmp.ne.s32.totalorder %s76, %s78
      %p82 = scmp.eq.s32.totalorder %s16, 0
      %p83 = por %p81, %p82
      %p84 = scmp.ne.s32.totalorder %s76, %s78
      %p85 = scmp.eq.s32.totalorder %s21, 1
      %p86 = por %p84, %p85
      %p87 = scmp.ne.s32.totalorder %s78, %s79
      %p88 = scmp.eq.s32.totalorder %s21, 0
      %p89 = por %p87, %p88
      %p90 = scmp.ne.s32.totalorder %s78, %s79
      %p91 = scmp.eq.s32.totalorder %s22, 1
      %p92 = por %p90, %p91
      %p94 = scmp.ne.s32.totalorder %s79, %s93
      %p95 = scmp.eq.s32.totalorder %s22, 0
      %p96 = por %p94, %p95
      %s98 = sadd.s32 %s97, 1
      %p101 = scmp.eq.s32.totalorder %s16, 1
      %p102 = scmp.ne.s32.totalorder %s97, %s99
      %p103 = scmp.eq.s32.totalorder %s16, 0
      %p104 = por %p102, %p103
      %p105 = scmp.ne.s32.totalorder %s97, %s99
      %p106 = scmp.eq.s32.totalorder %s21, 1
      %p107 = por %p105, %p106
      %p108 = scmp.ne.s32.totalorder %s99, %s100
      %p109 = scmp.eq.s32.totalorder %s21, 0
      %p110 = por %p108, %p109
      %p111 = scmp.ne.s32.totalorder %s99, %s100
      %p112 = scmp.eq.s32.totalorder %s22, 1
      %p113 = por %p111, %p112
      %p115 = scmp.ne.s32.totalorder %s100, %s114
      %p116 = scmp.eq.s32.totalorder %s22, 0
      %p117 = por %p115, %p116
      %s119 = sadd.s32 %s118, 1
      %p122 = scmp.eq.s32.totalorder %s16, 1
      %p123 = scmp.ne.s32.totalorder %s118, %s120
      %p124 = scmp.eq.s32.totalorder %s16, 0
      %p125 = por %p123, %p124
      %p126 = scmp.ne.s32.totalorder %s118, %s120
      %p127 = scmp.eq.s32.totalorder %s21, 1
      %p128 = por %p126, %p127
      %p129 = scmp.ne.s32.totalorder %s120, %s121
      %p130 = scmp.eq.s32.totalorder %s21, 0
      %p131 = por %p129, %p130
      %p132 = scmp.ne.s32.totalorder %s120, %s121
      %p133 = scmp.eq.s32.totalorder %s22, 1
      %p134 = por %p132, %p133
      %p136 = scmp.ne.s32.totalorder %s121, %s135
      %p137 = scmp.eq.s32.totalorder %s22, 0
      %p138 = por %p136, %p137
      %s140 = sadd.s32 %s139, 1
      %p143 = scmp.eq.s32.totalorder %s16, 1
      %p144 = scmp.ne.s32.totalorder %s139, %s141
      %p145 = scmp.eq.s32.totalorder %s16, 0
      %p146 = por %p144, %p145
      %p147 = scmp.ne.s32.totalorder %s139, %s141
      %p148 = scmp.eq.s32.totalorder %s21, 1
      %p149 = por %p147, %p148
      %p150 = scmp.ne.s32.totalorder %s141, %s142
      %p151 = scmp.eq.s32.totalorder %s21, 0
      %p152 = por %p150, %p151
      %p153 = scmp.ne.s32.totalorder %s141, %s142
      %p154 = scmp.eq.s32.totalorder %s22, 1
      %p155 = por %p153, %p154
      %p157 = scmp.ne.s32.totalorder %s142, %s156
      %p158 = scmp.eq.s32.totalorder %s22, 0
      %p159 = por %p157, %p158
      %s160 = ssub.s32 %s16, %s23
      %p161 = scmp.eq.s32.totalorder %s160, 0
      %s163 = sadd.s32 %s162, 1
      %s164 = scalar_select %p161, %s162, %s163
      %p167 = pneg %p161
      %p168 = scmp.eq.s32.totalorder %s16, 1
      %p169 = por %p167, %p168
      %p170 = scmp.ne.s32.totalorder %s162, %s165
      %p171 = scmp.eq.s32.totalorder %s16, 0
      %p172 = por %p170, %p171
      %p173 = scmp.ne.s32.totalorder %s162, %s165
      %p174 = scmp.eq.s32.totalorder %s21, 1
      %p175 = por %p173, %p174
      %p176 = scmp.ne.s32.totalorder %s165, %s166
      %p177 = scmp.eq.s32.totalorder %s21, 0
      %p178 = por %p176, %p177
      %p179 = scmp.ne.s32.totalorder %s165, %s166
      %p180 = scmp.eq.s32.totalorder %s22, 1
      %p181 = por %p179, %p180
      %p183 = scmp.ne.s32.totalorder %s166, %s182
      %p184 = scmp.eq.s32.totalorder %s22, 0
      %p185 = por %p183, %p184
      %p186 = scmp.le.s32.totalorder 1, %s16
      %p187 = scmp.lt.s32.totalorder %s16, 3
      %p188 = pnand %p186, %p187
      %p189 = pneg %p188
      // Predicated region
      $region9: #{tpu_custom_call.1} parent=5 // pred_check
        _
      $region10: #{tpu_custom_call.1} parent=5 // pred_check_branch
        %191 = sbr.rel (%p188) target = $region12
      $region11: #{tpu_custom_call.1} parent=5 // pred_region
        %s192 = ssub.s32 %s16, 1
        // Predicated region
        $region13: #{tpu_custom_call.1} parent=11 // pred_check
          %p193 = pneg %p89
        $region14: #{tpu_custom_call.1} parent=11 // pred_check_branch
          %195 = sbr.rel (%p193) target = $region16
        $region15: #{tpu_custom_call.1} parent=11 // pred_region
          _
        $region16: #{tpu_custom_call.1} parent=11 // pred_fallthru
          _
        // Predicated region
        $region17: #{tpu_custom_call.1} parent=11 // pred_check
          %p196 = pneg %p110
        $region18: #{tpu_custom_call.1} parent=11 // pred_check_branch
          %198 = sbr.rel (%p196) target = $region20
        $region19: #{tpu_custom_call.1} parent=11 // pred_region
          %200 = vsyncadd [#allocation3], 0
          %s201 = sshll.u32 %s3, 4
          %s202 = int_to_ptr.hbm [resolvable:$true] %s201
          %s203 = sshll.u32 [#allocation2], 4
          %s204 = int_to_ptr.vmem [resolvable:$true] %s203
          %209 = dma.hbm_to_vmem [thread:$0]  %s202, 256, %s204, [#allocation3], 128, 128, 8
        $region20: #{tpu_custom_call.1} parent=11 // pred_fallthru
          _
        // Predicated region
        $region21: #{tpu_custom_call.1} parent=11 // pred_check
          %p210 = pneg %p131
        $region22: #{tpu_custom_call.1} parent=11 // pred_check_branch
          %212 = sbr.rel (%p210) target = $region24
        $region23: #{tpu_custom_call.1} parent=11 // pred_region
          _
        $region24: #{tpu_custom_call.1} parent=11 // pred_fallthru
          _
        // Predicated region
        $region25: #{tpu_custom_call.1} parent=11 // pred_check
          %p213 = pneg %p152
        $region26: #{tpu_custom_call.1} parent=11 // pred_check_branch
          %215 = sbr.rel (%p213) target = $region28
        $region27: #{tpu_custom_call.1} parent=11 // pred_region
          _
        $region28: #{tpu_custom_call.1} parent=11 // pred_fallthru
          _
      $region12: #{tpu_custom_call.1} parent=5 // pred_fallthru
        _
      %p216 = scmp.lt.s32.totalorder %s16, 2
      // Predicated region
      $region29: #{tpu_custom_call.1} parent=5 // pred_check
        %p217 = pneg %p216
      $region30: #{tpu_custom_call.1} parent=5 // pred_check_branch
        %219 = sbr.rel (%p217) target = $region32
      $region31: #{tpu_custom_call.1} parent=5 // pred_region
        // Predicated region
        $region33: #{tpu_custom_call.1} parent=31 // pred_check
          %p220 = pneg %p36
        $region34: #{tpu_custom_call.1} parent=31 // pred_check_branch
          %222 = sbr.rel (%p220) target = $region36
        $region35: #{tpu_custom_call.1} parent=31 // pred_region
          %p223 = scmp.lt.s32.totalorder %s16, 1
          %s224 = scalar_select %p223, %s16, 1
          %s225 = smul.addr %s224, 8
          %s226 = scalar_lea.vmem %s0, %s225
        $region36: #{tpu_custom_call.1} parent=31 // pred_fallthru
          _
        // Predicated region
        $region37: #{tpu_custom_call.1} parent=31 // pred_check
          %p227 = pneg %p62
        $region38: #{tpu_custom_call.1} parent=31 // pred_check_branch
          %229 = sbr.rel (%p227) target = $region40
        $region39: #{tpu_custom_call.1} parent=31 // pred_region
          %p230 = scmp.lt.s32.totalorder %s16, 1
          %s231 = scalar_select %p230, %s16, 1
          %s232 = smul.addr %s231, 8
          %s233 = scalar_lea.vmem %s1, %s232
        $region40: #{tpu_custom_call.1} parent=31 // pred_fallthru
          _
      $region32: #{tpu_custom_call.1} parent=5 // pred_fallthru
        _
      %p234 = scmp.le.s32.totalorder 1, %s16
      %p235 = scmp.lt.s32.totalorder %s16, 3
      %p236 = pnand %p234, %p235
      %p237 = pneg %p236
      // Predicated region
      $region41: #{tpu_custom_call.1} parent=5 // pred_check
        _
      $region42: #{tpu_custom_call.1} parent=5 // pred_check_branch
        %239 = sbr.rel (%p236) target = $region44
      $region43: #{tpu_custom_call.1} parent=5 // pred_region
        %s240 = ssub.s32 %s16, 1
        // Predicated region
        $region45: #{tpu_custom_call.1} parent=43 // pred_check
          %p241 = pneg %p110
        $region46: #{tpu_custom_call.1} parent=43 // pred_check_branch
          %243 = sbr.rel (%p241) target = $region48
        $region47: #{tpu_custom_call.1} parent=43 // pred_region
          %245 = dma.done [#allocation3], 256
        $region48: #{tpu_custom_call.1} parent=43 // pred_fallthru
          _
        %p246 = scmp.lt.s32.totalorder %s21, 1
        %s247 = scalar_select %p246, %s21, 1
        %s248 = smul.addr %s247, 8
        %s249 = scalar_lea.vmem %s0, %s248
        %p250 = pneg %p42
        %p251 = pneg %p39
        %p252 = scmp.lt.s32.totalorder %s21, 1
        %s253 = scalar_select %p252, %s21, 1
        %s254 = smul.addr %s253, 8
        %s255 = scalar_lea.vmem %s1, %s254
        %p256 = pneg %p68
        %p257 = pneg %p65
        %p258 = pneg %p89
        %p259 = pneg %p86
        %p260 = pneg %p110
        %p261 = pneg %p107
        %p262 = pneg %p131
        %p263 = pneg %p128
        %p264 = pneg %p152
        %p265 = pneg %p149
        %p266 = pneg %p178
        %p267 = pneg %p175
        %s268 = sand.u32 %s165, 1
        %s269 = scalar_lea.sflag [#allocation4], %s268
        %s270 = sand.u32 %s165, 1
        %s271 = scalar_lea.vmem [#allocation5], %s270
        %p272 = scmp.lt.s32.totalorder %s21, 1
        %s273 = scalar_select %p272, %s21, 1
        %s274 = smul.addr %s273, 8
        %s275 = scalar_lea.vmem %s0, %s274
        %p276 = scmp.lt.s32.totalorder %s21, 1
        %s277 = scalar_select %p276, %s21, 1
        %s278 = smul.addr %s277, 8
        %s279 = scalar_lea.vmem %s1, %s278
        %v280 = vld [vmem:[#allocation2] sm:$0xff]
        %v281 = vld [vmem:[#allocation2 + $0x8] sm:$0xff]
        %v282 = vld [vmem:[%s275] sm:$0xff]
        %v283 = vld [vmem:[%s4] sm:$0x1]
        %v285 = vperm.slane %v283, 0
        %vm287 = vcmask 130048
        %v289 = vsel %vm287, %v282, 0
        %291 = vmatpush.msra.mxu0 0.0
        %292 = vmatpush.msra.mxu0 0.0
        %293 = vmatpush.msra.mxu0 0.0
        %294 = vmatpush.msra.mxu0 0.0
        %295 = vmatpush.msra.mxu0 0.0
        %296 = vmatpush.msra.mxu0 0.0
        %297 = vmatpush.msra.mxu0 0.0
        %298 = vmatpush.msra.mxu0 0.0
        %299 = vmatpush.msra.mxu0 0.0
        %300 = vmatpush.msra.mxu0 0.0
        %301 = vmatpush.msra.mxu0 0.0
        %302 = vmatpush.msra.mxu0 0.0
        %303 = vmatpush.msra.mxu0 0.0
        %304 = vmatpush.msra.mxu0 0.0
        %305 = vmatpush.msra.mxu0 %v281
        %306 = vmatpush.msra.mxu0 %v280
        %307 = vmatmul.f32.gmra.mxu0 %v289
        %v308 = vpop.f32.mrf.mxu0
        %v309 = vadd.f32 %v285, %v308
        %310 = vdwg.mxu0
        %v311 = vmax.f32 %v309, 0.0
        %v312 = vld [vmem:[%s5] sm:$0x1]
        %v314 = vperm.slane %v312, 0
        %v316 = vmul.f32 %v311, %v314
        %vm317 = vcmask 261120
        %v318 = vsel %vm317, %v316, 0.0
        %319 = vadd.xlane.f32.xlu0 %v318
        %v320 = vpop.xlane.xlu0 %319
        %v321 = vld [vmem:[%s279] sm:$0xff]
        %vm322 = vcmp.eq.f32.partialorder %v321, 1.0
        %vm323 = vcmp.eq.f32.partialorder %v321, 2.0
        %v324 = vsel %vm323, 0.0, -3.4028235e+38
        %v325 = vsel %vm322, %v320, %v324
        %v326 = vld [vmem:[%s2] sm:$0xff]
        %v327 = vadd.f32 %v325, %v326
        %vm328 = vcmask 7168
        %v329 = vsel %vm328, %v327, -inf
        %v330 = vrot.slane %v329, 4
        %v331 = vmax.f32 %v329, %v330
        %v332 = vrot.slane %v331, 2
        %v333 = vmax.f32 %v331, %v332
        %v334 = vrot.slane %v333, 1
        %v335 = vmax.f32 %v333, %v334
        %v336 = vsub.f32 %v327, %v335
        %v337 = vmul.f32 %v336, 1.442695
        %v338 = vpow.pop %v337
        %v339 = vsel %vm328, %v338, 0.0
        %v340 = vrot.slane %v339, 4
        %v341 = vadd.f32 %v339, %v340
        %v342 = vrot.slane %v341, 2
        %v343 = vadd.f32 %v341, %v342
        %v344 = vrot.slane %v343, 1
        %v345 = vadd.f32 %v343, %v344
        %v346 = vrcp.pop %v345
        %v347 = vmul.f32 %v338, %v346
        %348 = vxpose.xlu0.b32.start [1/16] %v347, 128
        %349 = vxpose.xlu0.b32.cont [2/16] 0.0, 128
        %350 = vxpose.xlu0.b32.cont [3/16] 0.0, 128
        %351 = vxpose.xlu0.b32.cont [4/16] 0.0, 128
        %352 = vxpose.xlu0.b32.cont [5/16] 0.0, 128
        %353 = vxpose.xlu0.b32.cont [6/16] 0.0, 128
        %354 = vxpose.xlu0.b32.cont [7/16] 0.0, 128
        %355 = vxpose.xlu0.b32.cont [8/16] 0.0, 128
        %356 = vxpose.xlu0.b32.cont [9/16] 0.0, 128
        %357 = vxpose.xlu0.b32.cont [10/16] 0.0, 128
        %358 = vxpose.xlu0.b32.cont [11/16] 0.0, 128
        %359 = vxpose.xlu0.b32.cont [12/16] 0.0, 128
        %360 = vxpose.xlu0.b32.cont [13/16] 0.0, 128
        %361 = vxpose.xlu0.b32.cont [14/16] 0.0, 128
        %362 = vxpose.xlu0.b32.cont [15/16] 0.0, 128
        %363 = vxpose.xlu0.b32.end [16/16] 0.0, 128
        %v364 = vpop.trf.xlu0
        %v365 = vpop.trf.xlu0
        %v366 = vpop.trf.xlu0
        %v367 = vpop.trf.xlu0
        %v368 = vpop.trf.xlu0
        %v369 = vpop.trf.xlu0
        %v370 = vpop.trf.xlu0
        %v371 = vpop.trf.xlu0
        %v372 = vpop.trf.xlu0
        %v373 = vpop.trf.xlu0
        %v374 = vpop.trf.xlu0
        %v375 = vpop.trf.xlu0
        %v376 = vpop.trf.xlu0
        %v377 = vpop.trf.xlu0
        %v378 = vpop.trf.xlu0
        %v379 = vpop.trf.xlu0
        %vm380 = vcmask 64512
        %v382 = vsel %vm380, %v364, 0
        %384 = vmatpush.msra.mxu0 0.0
        %385 = vmatpush.msra.mxu0 0.0
        %386 = vmatpush.msra.mxu0 0.0
        %387 = vmatpush.msra.mxu0 0.0
        %388 = vmatpush.msra.mxu0 0.0
        %389 = vmatpush.msra.mxu0 0.0
        %390 = vmatpush.msra.mxu0 0.0
        %391 = vmatpush.msra.mxu0 0.0
        %392 = vmatpush.msra.mxu0 0.0
        %393 = vmatpush.msra.mxu0 0.0
        %394 = vmatpush.msra.mxu0 0.0
        %395 = vmatpush.msra.mxu0 0.0
        %396 = vmatpush.msra.mxu0 0.0
        %397 = vmatpush.msra.mxu0 0.0
        %398 = vmatpush.msra.mxu0 0.0
        %399 = vmatpush.msra.mxu0 %v282
        %400 = vmatmul.f32.gmra.mxu0 %v382
        %v401 = vpop.f32.mrf.mxu0
        %v402 = vadd.f32 0.0, %v401
        %403 = vdwg.mxu0
        %vm404 = vcmask 122880
        %405 = vst.msk [vmem:[%s271] sm:$0x1] %vm404, %v402
        %s406 = sand.u32 %s165, 1
        %s407 = scalar_lea.sflag [#allocation4], %s406
        %s408 = sand.u32 %s165, 1
        %s409 = scalar_lea.vmem [#allocation5], %s408
        // Predicated region
        $region49: #{tpu_custom_call.1} parent=43 // pred_check
          %p410 = pneg %p175
        $region50: #{tpu_custom_call.1} parent=43 // pred_check_branch
          %412 = sbr.rel (%p410) target = $region52
        $region51: #{tpu_custom_call.1} parent=43 // pred_region
          %414 = vsyncadd %s407, 0
          %s415 = scalar_lea.hbm %s6, %s21
          %s417 = sshll.u32 %s409, 4
          %s418 = int_to_ptr.vmem [resolvable:$true] %s417
          %s419 = sshll.u32 %s415, 4
          %s420 = int_to_ptr.hbm [resolvable:$true] %s419
          %422 = dma.vmem_to_hbm [thread:$0]  %s418, 16, %s420, %s407
        $region52: #{tpu_custom_call.1} parent=43 // pred_fallthru
          _
      $region44: #{tpu_custom_call.1} parent=5 // pred_fallthru
        _
      %p423 = scmp.le.s32.totalorder 2, %s16
      // Predicated region
      $region53: #{tpu_custom_call.1} parent=5 // pred_check
        %p424 = pneg %p423
      $region54: #{tpu_custom_call.1} parent=5 // pred_check_branch
        %426 = sbr.rel (%p424) target = $region56
      $region55: #{tpu_custom_call.1} parent=5 // pred_region
        %s427 = ssub.s32 %s16, 2
        // Predicated region
        $region57: #{tpu_custom_call.1} parent=55 // pred_check
          %p428 = pneg %p181
        $region58: #{tpu_custom_call.1} parent=55 // pred_check_branch
          %430 = sbr.rel (%p428) target = $region60
        $region59: #{tpu_custom_call.1} parent=55 // pred_region
          %s431 = sand.u32 %s166, 1
          %s432 = scalar_lea.sflag [#allocation4], %s431
          %s433 = sand.u32 %s166, 1
          %s434 = scalar_lea.vmem [#allocation5], %s433
          %436 = dma.done %s432, 16
        $region60: #{tpu_custom_call.1} parent=55 // pred_fallthru
          _
      $region56: #{tpu_custom_call.1} parent=5 // pred_fallthru
        _
    $region6: #{tpu_custom_call.1} parent=1 // loop_footer
      %s20 = sadd.s32 1, %s16
    $region7: #{tpu_custom_call.1} parent=1 // loop_footer_branch
      %15 = sbr.rel target = $region3
    $region8: #{tpu_custom_call.1} parent=1 // loop_exit
      _
    %437 = vsyncpa [#allocation3], 1
    %s438 = scalar_lea.sflag [#allocation3], 1
    %439 = vsyncpa %s438, 1
    %440 = vsyncpa [#allocation4], 1
    %s441 = scalar_lea.sflag [#allocation4], 1
    %442 = vsyncpa %s441, 1

</llo_original>
